<compile_context>
chip_gen: v5e
topology: v5e:2x2
jax: 0.10.0
libtpu: 0.0.40
codegen_flags: <defaults>
</compile_context>

<pallas_src>
import jax
import jax.numpy as jnp
from jax import lax
from jax.experimental import pallas as pl
from jax.experimental.pallas import tpu as pltpu

LANE = 128                       # vreg lane width
SUBLANE = 8                      # vreg sublane count
TARGET_BLOCK_BYTES = 2 << 20     # ~2 MiB per input block per grid step
NUM_CHUNKS = 2                   # leading "parallel" grid axis (v7x has 2 TCs)


def _round_up(x, m):
    return (x + m - 1) // m * m


def _fused_sums_kernel(a_ref, b_ref, saa_ref, sbb_ref, sab_ref,
                       acc_aa, acc_bb, acc_ab):
    """One streaming pass accumulating sum(a*a), sum(b*b), sum(a*b).

    a_ref / b_ref: (G, 8, 128) blocks.  acc_*: (8, 128) f32 VMEM scratch.
    Outputs: per-chunk partial sums, (1, 1, 1) blocks of (NUM_CHUNKS, 1, 1).
    """
    j = pl.program_id(1)

    @pl.when(j == 0)
    def _():
        acc_aa[...] = jnp.zeros_like(acc_aa)
        acc_bb[...] = jnp.zeros_like(acc_bb)
        acc_ab[...] = jnp.zeros_like(acc_ab)

    a = a_ref[...].astype(jnp.float32)           # (G, 8, 128)
    b = b_ref[...].astype(jnp.float32)
    # Reduction over the leading axis is pure VALU vreg adds (no XLU in the
    # hot loop); it stays hidden under the HBM DMA of the next block.
    acc_aa[...] += jnp.sum(a * a, axis=0)
    acc_bb[...] += jnp.sum(b * b, axis=0)
    acc_ab[...] += jnp.sum(a * b, axis=0)

    @pl.when(j == pl.num_programs(1) - 1)
    def _():
        # Single epilogue cross-lane/sublane reduce per chunk.
        saa_ref[0] = jnp.sum(acc_aa[...], axis=(0, 1), keepdims=True)
        sbb_ref[0] = jnp.sum(acc_bb[...], axis=(0, 1), keepdims=True)
        sab_ref[0] = jnp.sum(acc_ab[...], axis=(0, 1), keepdims=True)


def _to_slab(x, chunk_elems):
    """Flatten, zero-pad to a multiple of chunk_elems, view as (groups, 8, 128)."""
    flat = jnp.ravel(x)                       # keeps caller dtype (bf16 stays bf16)
    pad = (-flat.size) % chunk_elems
    if pad:                                   # trace-time check: no copy if aligned
        flat = jnp.pad(flat, (0, pad))
    return flat.reshape(-1, SUBLANE, LANE)


def target_loss(input, target):
    assert input.shape == target.shape, "MSELoss requires matching shapes"
    n_elems = input.size
    assert n_elems > 0

    rows = _round_up(pl.cdiv(n_elems, LANE), SUBLANE)
    # Cap each input block at ~TARGET_BLOCK_BYTES (dtype-aware) so two
    # double-buffered inputs stay far below every chip's scoped-VMEM default.
    itemsize = max(input.dtype.itemsize, target.dtype.itemsize)
    max_rows = max(SUBLANE,
                   (TARGET_BLOCK_BYTES // (LANE * itemsize)) // SUBLANE * SUBLANE)
    block_rows = min(max_rows, rows)                # both are multiples of 8
    groups_per_block = block_rows // SUBLANE
    chunk_elems = NUM_CHUNKS * block_rows * LANE

    a3 = _to_slab(input, chunk_elems)
    b3 = _to_slab(target, chunk_elems)
    total_groups = a3.shape[0]
    steps = total_groups // (NUM_CHUNKS * groups_per_block)  # per-chunk steps
    grid = (NUM_CHUNKS, steps)

    # Chunk i streams the contiguous block range [i*steps, (i+1)*steps).
    in_spec = pl.BlockSpec((groups_per_block, SUBLANE, LANE),
                           lambda i, j: (i * steps + j, 0, 0))
    out_spec = pl.BlockSpec((1, 1, 1), lambda i, j: (i, 0, 0))

    bytes_in = (a3.size * a3.dtype.itemsize) + (b3.size * b3.dtype.itemsize)
    paa, pbb, pab = pl.pallas_call(
        _fused_sums_kernel,
        out_shape=tuple(jax.ShapeDtypeStruct((NUM_CHUNKS, 1, 1), jnp.float32)
                        for _ in range(3)),
        grid=grid,
        in_specs=[in_spec, in_spec],
        out_specs=(out_spec, out_spec, out_spec),
        scratch_shapes=[pltpu.VMEM((SUBLANE, LANE), jnp.float32)
                        for _ in range(3)],
        compiler_params=pltpu.CompilerParams(
            dimension_semantics=("parallel", "arbitrary")),
        cost_estimate=pl.CostEstimate(
            flops=6 * a3.size,
            transcendentals=0,
            bytes_accessed=bytes_in + NUM_CHUNKS * 3 * 4),
    )(a3, b3)

    # Combine the per-chunk partials (3 tiny scalars each) in JAX glue.
    saa = jnp.sum(paa)
    sbb = jnp.sum(pbb)
    sab = jnp.sum(pab)

    # sum((a/||a|| - b/||b||)^2) = 2 - 2 * <a,b> / (||a|| * ||b||)
    cos = sab * lax.rsqrt(saa * sbb)
    return ((2.0 - 2.0 * cos) / jnp.float32(n_elems)).astype(jnp.float32)


def _reference(a, b):
    a_n = a / jnp.linalg.norm(a)
    b_n = b / jnp.linalg.norm(b)
    return jnp.mean((a_n - b_n) ** 2)


if __name__ == "__main__":
    key = jax.random.PRNGKey(0)
    k1, k2 = jax.random.split(key)
    x = jax.random.normal(k1, (2, 4, 16, 16), dtype=jnp.float32)   # NCHW "input"
    y = jax.random.normal(k2, (2, 4, 16, 16), dtype=jnp.float32)   # NCHW "target"

    out = target_loss(x, y)
    jax.block_until_ready(out)

    ref = _reference(x, y)
    assert jnp.allclose(out, ref, rtol=1e-4, atol=1e-7), (out, ref)
    print("KERNEL_OK")
</pallas_src>

<mosaic_0001>
module attributes {stable_mosaic.version = 11 : i64} {
  func.func @_fused_sums_kernel(%arg0: i32, %arg1: i32, %arg2: memref<2x8x128xf32, #tpu.memory_space<vmem>>, %arg3: memref<2x8x128xf32, #tpu.memory_space<vmem>>, %arg4: memref<1x1x1xf32, #tpu.memory_space<vmem>>, %arg5: memref<1x1x1xf32, #tpu.memory_space<vmem>>, %arg6: memref<1x1x1xf32, #tpu.memory_space<vmem>>, %arg7: memref<8x128xf32, #tpu.memory_space<vmem>>, %arg8: memref<8x128xf32, #tpu.memory_space<vmem>>, %arg9: memref<8x128xf32, #tpu.memory_space<vmem>>) attributes {dimension_semantics = [#tpu.dimension_semantics<parallel>, #tpu.dimension_semantics<arbitrary>], iteration_bounds = array<i64: 2, 1>, scalar_prefetch = 0 : i64, scratch_operands = 3 : i64, tpu.core_type = #tpu.core_type<tc>, window_params = [{transform_indices = @transform_0, window_bounds = array<i64: 2, 8, 128>}, {transform_indices = @transform_1, window_bounds = array<i64: 2, 8, 128>}, {transform_indices = @transform_2, window_bounds = array<i64: 1, 1, 1>}, {transform_indices = @transform_3, window_bounds = array<i64: 1, 1, 1>}, {transform_indices = @transform_4, window_bounds = array<i64: 1, 1, 1>}]} {
    %c0_i32 = arith.constant 0 : i32
    %0 = arith.cmpi eq, %arg1, %c0_i32 : i32
    %1 = arith.extui %0 : i1 to i32
    %c0_i32_0 = arith.constant 0 : i32
    %2 = arith.cmpi ne, %1, %c0_i32_0 : i32
    scf.if %2 {
      %cst_22 = arith.constant 0.000000e+00 : f32
      %23 = vector.broadcast %cst_22 : f32 to vector<8x128xf32>
      %c0_23 = arith.constant 0 : index
      %c0_24 = arith.constant 0 : index
      %24 = vector.load %arg7[%c0_23, %c0_24] : memref<8x128xf32, #tpu.memory_space<vmem>>, vector<8x128xf32>
      tpu.vector_store %arg7[%c0_23, %c0_24], %23 {strides = array<i32>} : memref<8x128xf32, #tpu.memory_space<vmem>>, vector<8x128xf32>,
      %cst_25 = arith.constant 0.000000e+00 : f32
      %25 = vector.broadcast %cst_25 : f32 to vector<8x128xf32>
      %c0_26 = arith.constant 0 : index
      %c0_27 = arith.constant 0 : index
      %26 = vector.load %arg8[%c0_26, %c0_27] : memref<8x128xf32, #tpu.memory_space<vmem>>, vector<8x128xf32>
      tpu.vector_store %arg8[%c0_26, %c0_27], %25 {strides = array<i32>} : memref<8x128xf32, #tpu.memory_space<vmem>>, vector<8x128xf32>,
      %cst_28 = arith.constant 0.000000e+00 : f32
      %27 = vector.broadcast %cst_28 : f32 to vector<8x128xf32>
      %c0_29 = arith.constant 0 : index
      %c0_30 = arith.constant 0 : index
      %28 = vector.load %arg9[%c0_29, %c0_30] : memref<8x128xf32, #tpu.memory_space<vmem>>, vector<8x128xf32>
      tpu.vector_store %arg9[%c0_29, %c0_30], %27 {strides = array<i32>} : memref<8x128xf32, #tpu.memory_space<vmem>>, vector<8x128xf32>,
    } else {
    }
    %c0 = arith.constant 0 : index
    %c0_1 = arith.constant 0 : index
    %c0_2 = arith.constant 0 : index
    %3 = vector.load %arg2[%c0, %c0_1, %c0_2] : memref<2x8x128xf32, #tpu.memory_space<vmem>>, vector<2x8x128xf32>
    %c0_3 = arith.constant 0 : index
    %c0_4 = arith.constant 0 : index
    %c0_5 = arith.constant 0 : index
    %4 = vector.load %arg3[%c0_3, %c0_4, %c0_5] : memref<2x8x128xf32, #tpu.memory_space<vmem>>, vector<2x8x128xf32>
    %c0_6 = arith.constant 0 : index
    %c0_7 = arith.constant 0 : index
    %5 = vector.load %arg7[%c0_6, %c0_7] : memref<8x128xf32, #tpu.memory_space<vmem>>, vector<8x128xf32>
    %6 = arith.mulf %3, %3 : vector<2x8x128xf32>
    %cst = arith.constant dense<0.000000e+00> : vector<8x128xf32>
    %7 = vector.multi_reduction <add>, %6, %cst [0] : vector<2x8x128xf32> to vector<8x128xf32>
    %8 = arith.addf %5, %7 : vector<8x128xf32>
    %c0_8 = arith.constant 0 : index
    %c0_9 = arith.constant 0 : index
    %9 = vector.load %arg7[%c0_8, %c0_9] : memref<8x128xf32, #tpu.memory_space<vmem>>, vector<8x128xf32>
    tpu.vector_store %arg7[%c0_8, %c0_9], %8 {strides = array<i32>} : memref<8x128xf32, #tpu.memory_space<vmem>>, vector<8x128xf32>,
    %c0_10 = arith.constant 0 : index
    %c0_11 = arith.constant 0 : index
    %10 = vector.load %arg8[%c0_10, %c0_11] : memref<8x128xf32, #tpu.memory_space<vmem>>, vector<8x128xf32>
    %11 = arith.mulf %4, %4 : vector<2x8x128xf32>
    %cst_12 = arith.constant dense<0.000000e+00> : vector<8x128xf32>
    %12 = vector.multi_reduction <add>, %11, %cst_12 [0] : vector<2x8x128xf32> to vector<8x128xf32>
    %13 = arith.addf %10, %12 : vector<8x128xf32>
    %c0_13 = arith.constant 0 : index
    %c0_14 = arith.constant 0 : index
    %14 = vector.load %arg8[%c0_13, %c0_14] : memref<8x128xf32, #tpu.memory_space<vmem>>, vector<8x128xf32>
    tpu.vector_store %arg8[%c0_13, %c0_14], %13 {strides = array<i32>} : memref<8x128xf32, #tpu.memory_space<vmem>>, vector<8x128xf32>,
    %c0_15 = arith.constant 0 : index
    %c0_16 = arith.constant 0 : index
    %15 = vector.load %arg9[%c0_15, %c0_16] : memref<8x128xf32, #tpu.memory_space<vmem>>, vector<8x128xf32>
    %16 = arith.mulf %3, %4 : vector<2x8x128xf32>
    %cst_17 = arith.constant dense<0.000000e+00> : vector<8x128xf32>
    %17 = vector.multi_reduction <add>, %16, %cst_17 [0] : vector<2x8x128xf32> to vector<8x128xf32>
    %18 = arith.addf %15, %17 : vector<8x128xf32>
    %c0_18 = arith.constant 0 : index
    %c0_19 = arith.constant 0 : index
    %19 = vector.load %arg9[%c0_18, %c0_19] : memref<8x128xf32, #tpu.memory_space<vmem>>, vector<8x128xf32>
    tpu.vector_store %arg9[%c0_18, %c0_19], %18 {strides = array<i32>} : memref<8x128xf32, #tpu.memory_space<vmem>>, vector<8x128xf32>,
    %c0_i32_20 = arith.constant 0 : i32
    %20 = arith.cmpi eq, %arg1, %c0_i32_20 : i32
    %21 = arith.extui %20 : i1 to i32
    %c0_i32_21 = arith.constant 0 : i32
    %22 = arith.cmpi ne, %21, %c0_i32_21 : i32
    scf.if %22 {
      %c0_22 = arith.constant 0 : index
      %c0_23 = arith.constant 0 : index
      %23 = vector.load %arg7[%c0_22, %c0_23] : memref<8x128xf32, #tpu.memory_space<vmem>>, vector<8x128xf32>
      %24 = vector.shape_cast %23 : vector<8x128xf32> to vector<1x8x128xf32>
      %cst_24 = arith.constant dense<0.000000e+00> : vector<1xf32>
      %25 = vector.multi_reduction <add>, %24, %cst_24 [1, 2] : vector<1x8x128xf32> to vector<1xf32>
      %26 = vector.shape_cast %25 : vector<1xf32> to vector<1x1x1xf32>
      %27 = vector.extract %26[0, 0, 0] : f32 from vector<1x1x1xf32>
      %28 = vector.broadcast %27 : f32 to vector<1x1xf32>
      %c0_25 = arith.constant 0 : index
      %c0_26 = arith.constant 0 : index
      %c0_27 = arith.constant 0 : index
      %29 = vector.load %arg4[%c0_25, %c0_26, %c0_27] : memref<1x1x1xf32, #tpu.memory_space<vmem>>, vector<1x1x1xf32>
      %30 = vector.shape_cast %29 : vector<1x1x1xf32> to vector<1x1xf32>
      %31 = vector.shape_cast %28 : vector<1x1xf32> to vector<1x1x1xf32>
      tpu.vector_store %arg4[%c0_25, %c0_26, %c0_27], %31 {strides = array<i32>} : memref<1x1x1xf32, #tpu.memory_space<vmem>>, vector<1x1x1xf32>,
      %c0_28 = arith.constant 0 : index
      %c0_29 = arith.constant 0 : index
      %32 = vector.load %arg8[%c0_28, %c0_29] : memref<8x128xf32, #tpu.memory_space<vmem>>, vector<8x128xf32>
      %33 = vector.shape_cast %32 : vector<8x128xf32> to vector<1x8x128xf32>
      %cst_30 = arith.constant dense<0.000000e+00> : vector<1xf32>
      %34 = vector.multi_reduction <add>, %33, %cst_30 [1, 2] : vector<1x8x128xf32> to vector<1xf32>
      %35 = vector.shape_cast %34 : vector<1xf32> to vector<1x1x1xf32>
      %36 = vector.extract %35[0, 0, 0] : f32 from vector<1x1x1xf32>
      %37 = vector.broadcast %36 : f32 to vector<1x1xf32>
      %c0_31 = arith.constant 0 : index
      %c0_32 = arith.constant 0 : index
      %c0_33 = arith.constant 0 : index
      %38 = vector.load %arg5[%c0_31, %c0_32, %c0_33] : memref<1x1x1xf32, #tpu.memory_space<vmem>>, vector<1x1x1xf32>
      %39 = vector.shape_cast %38 : vector<1x1x1xf32> to vector<1x1xf32>
      %40 = vector.shape_cast %37 : vector<1x1xf32> to vector<1x1x1xf32>
      tpu.vector_store %arg5[%c0_31, %c0_32, %c0_33], %40 {strides = array<i32>} : memref<1x1x1xf32, #tpu.memory_space<vmem>>, vector<1x1x1xf32>,
      %c0_34 = arith.constant 0 : index
      %c0_35 = arith.constant 0 : index
      %41 = vector.load %arg9[%c0_34, %c0_35] : memref<8x128xf32, #tpu.memory_space<vmem>>, vector<8x128xf32>
      %42 = vector.shape_cast %41 : vector<8x128xf32> to vector<1x8x128xf32>
      %cst_36 = arith.constant dense<0.000000e+00> : vector<1xf32>
      %43 = vector.multi_reduction <add>, %42, %cst_36 [1, 2] : vector<1x8x128xf32> to vector<1xf32>
      %44 = vector.shape_cast %43 : vector<1xf32> to vector<1x1x1xf32>
      %45 = vector.extract %44[0, 0, 0] : f32 from vector<1x1x1xf32>
      %46 = vector.broadcast %45 : f32 to vector<1x1xf32>
      %c0_37 = arith.constant 0 : index
      %c0_38 = arith.constant 0 : index
      %c0_39 = arith.constant 0 : index
      %47 = vector.load %arg6[%c0_37, %c0_38, %c0_39] : memref<1x1x1xf32, #tpu.memory_space<vmem>>, vector<1x1x1xf32>
      %48 = vector.shape_cast %47 : vector<1x1x1xf32> to vector<1x1xf32>
      %49 = vector.shape_cast %46 : vector<1x1xf32> to vector<1x1x1xf32>
      tpu.vector_store %arg6[%c0_37, %c0_38, %c0_39], %49 {strides = array<i32>} : memref<1x1x1xf32, #tpu.memory_space<vmem>>, vector<1x1x1xf32>,
    } else {
    }
    return
  }
  func.func @transform_0(%arg0: i32, %arg1: i32) -> (i32, i32, i32) {
    %c1_i32 = arith.constant 1 : i32
    %0 = arith.muli %arg0, %c1_i32 : i32
    %1 = arith.addi %0, %arg1 : i32
    %c0_i32 = arith.constant 0 : i32
    %c0_i32_0 = arith.constant 0 : i32
    %c0_i32_1 = arith.constant 0 : i32
    return %1, %c0_i32, %c0_i32_0 : i32, i32, i32
  }
  func.func @transform_1(%arg0: i32, %arg1: i32) -> (i32, i32, i32) {
    %c1_i32 = arith.constant 1 : i32
    %0 = arith.muli %arg0, %c1_i32 : i32
    %1 = arith.addi %0, %arg1 : i32
    %c0_i32 = arith.constant 0 : i32
    %c0_i32_0 = arith.constant 0 : i32
    %c0_i32_1 = arith.constant 0 : i32
    return %1, %c0_i32, %c0_i32_0 : i32, i32, i32
  }
  func.func @transform_2(%arg0: i32, %arg1: i32) -> (i32, i32, i32) {
    %c0_i32 = arith.constant 0 : i32
    %c0_i32_0 = arith.constant 0 : i32
    %c0_i32_1 = arith.constant 0 : i32
    return %arg0, %c0_i32, %c0_i32_0 : i32, i32, i32
  }
  func.func @transform_3(%arg0: i32, %arg1: i32) -> (i32, i32, i32) {
    %c0_i32 = arith.constant 0 : i32
    %c0_i32_0 = arith.constant 0 : i32
    %c0_i32_1 = arith.constant 0 : i32
    return %arg0, %c0_i32, %c0_i32_0 : i32, i32, i32
  }
  func.func @transform_4(%arg0: i32, %arg1: i32) -> (i32, i32, i32) {
    %c0_i32 = arith.constant 0 : i32
    %c0_i32_0 = arith.constant 0 : i32
    %c0_i32_1 = arith.constant 0 : i32
    return %arg0, %c0_i32, %c0_i32_0 : i32, i32, i32
  }
}

</mosaic_0001>

<llo_original>
// kernel: tpu_custom_call.1
$region0: #{tpu_custom_call.1}
  #allocation0 [shape = 'u32[]', space=smem, size = 0x4, offset = 0x4, fixed_abs, tag = 'smem constant byte address 0x4 - core index']
  #allocation1 [shape = 'u32[72,128]{1,0:T(1,128)}', space=vmem, size = 0x9000, scoped, tag = 'internal scratch']
  #allocation2 [shape = 'f32[8,128]{1,0:T(8,128)}', space=vmem, size = 0x1000, scoped, tag = 'scratch operand']
  #allocation3 [shape = 'f32[8,128]{1,0:T(8,128)}', space=vmem, size = 0x1000, scoped, tag = 'scratch operand']
  #allocation4 [shape = 'f32[8,128]{1,0:T(8,128)}', space=vmem, size = 0x1000, scoped, tag = 'scratch operand']
  %s0 = inlined_call_operand.hbm [shape: f32[4,8,128], index: 0, kind: input, shape index: {}]
  %s1 = inlined_call_operand.hbm [shape: f32[4,8,128], index: 1, kind: input, shape index: {}]
  %s2 = inlined_call_operand.vmem [shape: f32[2,1,1], index: 2, kind: output, shape index: {0}]
  %s3 = inlined_call_operand.vmem [shape: f32[2,1,1], index: 3, kind: output, shape index: {1}]
  %s4 = inlined_call_operand.vmem [shape: f32[2,1,1], index: 4, kind: output, shape index: {2}]
  %5 = xla_tuple %s2, %s3, %s4
  %s6 = sld [smem:[#allocation0]]
  $region73: #{tpu_custom_call.1} parent=0
    _
  %s8 = ssub.s32 1, %s6
  %s9 = scalar_select 0, %s8, %s6
  $region1: #{tpu_custom_call.1} parent=0
    #allocation5 [shape = 'u8[16384]{0}', space=vmem, size = 0x4000, scoped, tag = 'input window, operand 0']
    #allocation6 [shape = 's32[2]{0}', space=sflag, size = 0x8, scoped, tag = 'scoped memory for tpu_custom_call.1']
    #allocation7 [shape = 'u8[16384]{0}', space=vmem, size = 0x4000, scoped, tag = 'input window, operand 1']
    #allocation8 [shape = 's32[2]{0}', space=sflag, size = 0x8, scoped, tag = 'scoped memory for tpu_custom_call.1']
    %10 = vsyncpa [#allocation6], 0
    %s11 = scalar_lea.sflag [#allocation6], 1
    %12 = vsyncpa %s11, 0
    %13 = vsyncpa [#allocation8], 0
    %s14 = scalar_lea.sflag [#allocation8], 1
    %15 = vsyncpa %s14, 0
    loop: start=0, step=1, limit=4
    $region2: #{tpu_custom_call.1} parent=1 // loop_pre_header
      _
    $region3: #{tpu_custom_call.1} parent=1 // loop_header
      %s17 = sphi 0, %s21
      %p18 = scmp.ge.s32.totalorder %s17, 4
      %s24 = sphi 0, %s36
      %s25 = sphi 0, %s32
      %s26 = sphi 0, %s24
      %s27 = sphi 0, %s25
      %s28 = sphi 0, %s26
      %s29 = sphi 0, %s27
      %s41 = sphi 0, %s43
      %s44 = sphi 0, %s41
      %s45 = sphi 0, %s44
      %s61 = sphi 0, %s45
      %s69 = sphi 0, %s71
      %s72 = sphi 0, %s69
      %s73 = sphi 0, %s72
      %s89 = sphi 0, %s73
      %s95 = sphi 0, %s97
      %s98 = sphi 0, %s95
      %s99 = sphi 0, %s98
      %s115 = sphi 0, %s99
      %s121 = sphi 0, %s123
      %s124 = sphi 0, %s121
      %s125 = sphi 0, %s124
      %s141 = sphi 0, %s125
      %s147 = sphi 0, %s149
      %s150 = sphi 0, %s147
      %s151 = sphi 0, %s150
      %s167 = sphi 0, %s151
    $region4: #{tpu_custom_call.1} parent=1 // loop_header_branch
      %20 = sbr.rel (%p18) target = $region8
    $region5: #{tpu_custom_call.1} parent=1 // loop_body
      %s22 = ssub.s32 %s17, 1
      %s23 = ssub.s32 %s17, 2
      %s30 = sadd.s32 1, %s25
      %p31 = scmp.ge.s32.totalorder %s30, 1
      %s32 = scalar_select %p31, 0, %s30
      %s33 = sadd.s32 1, %s24
      %s34 = scalar_select %p31, %s33, %s24
      %p35 = scmp.ge.s32.totalorder %s34, 2
      %s36 = scalar_select %p35, 0, %s34
      %s37 = sadd.s32 %s24, %s25
      %s38 = sadd.s32 %s36, %s32
      %s39 = ssub.s32 %s37, %s38
      %p40 = scmp.eq.s32.totalorder %s39, 0
      %s42 = sadd.s32 %s41, 1
      %s43 = scalar_select %p40, %s41, %s42
      %p46 = pneg %p40
      %p47 = scmp.eq.s32.totalorder %s17, 1
      %p48 = por %p46, %p47
      %p49 = scmp.ne.s32.totalorder %s41, %s44
      %p50 = scmp.eq.s32.totalorder %s17, 0
      %p51 = por %p49, %p50
      %p52 = scmp.ne.s32.totalorder %s41, %s44
      %p53 = scmp.eq.s32.totalorder %s22, 1
      %p54 = por %p52, %p53
      %p55 = scmp.ne.s32.totalorder %s44, %s45
      %p56 = scmp.eq.s32.totalorder %s22, 0
      %p57 = por %p55, %p56
      %p58 = scmp.ne.s32.totalorder %s44, %s45
      %p59 = scmp.eq.s32.totalorder %s23, 1
      %p60 = por %p58, %p59
      %p62 = scmp.ne.s32.totalorder %s45, %s61
      %p63 = scmp.eq.s32.totalorder %s23, 0
      %p64 = por %p62, %p63
      %s65 = sadd.s32 %s24, %s25
      %s66 = sadd.s32 %s36, %s32
      %s67 = ssub.s32 %s65, %s66
      %p68 = scmp.eq.s32.totalorder %s67, 0
      %s70 = sadd.s32 %s69, 1
      %s71 = scalar_select %p68, %s69, %s70
      %p74 = pneg %p68
      %p75 = scmp.eq.s32.totalorder %s17, 1
      %p76 = por %p74, %p75
      %p77 = scmp.ne.s32.totalorder %s69, %s72
      %p78 = scmp.eq.s32.totalorder %s17, 0
      %p79 = por %p77, %p78
      %p80 = scmp.ne.s32.totalorder %s69, %s72
      %p81 = scmp.eq.s32.totalorder %s22, 1
      %p82 = por %p80, %p81
      %p83 = scmp.ne.s32.totalorder %s72, %s73
      %p84 = scmp.eq.s32.totalorder %s22, 0
      %p85 = por %p83, %p84
      %p86 = scmp.ne.s32.totalorder %s72, %s73
      %p87 = scmp.eq.s32.totalorder %s23, 1
      %p88 = por %p86, %p87
      %p90 = scmp.ne.s32.totalorder %s73, %s89
      %p91 = scmp.eq.s32.totalorder %s23, 0
      %p92 = por %p90, %p91
      %s93 = ssub.s32 %s24, %s36
      %p94 = scmp.eq.s32.totalorder %s93, 0
      %s96 = sadd.s32 %s95, 1
      %s97 = scalar_select %p94, %s95, %s96
      %p100 = pneg %p94
      %p101 = scmp.eq.s32.totalorder %s17, 1
      %p102 = por %p100, %p101
      %p103 = scmp.ne.s32.totalorder %s95, %s98
      %p104 = scmp.eq.s32.totalorder %s17, 0
      %p105 = por %p103, %p104
      %p106 = scmp.ne.s32.totalorder %s95, %s98
      %p107 = scmp.eq.s32.totalorder %s22, 1
      %p108 = por %p106, %p107
      %p109 = scmp.ne.s32.totalorder %s98, %s99
      %p110 = scmp.eq.s32.totalorder %s22, 0
      %p111 = por %p109, %p110
      %p112 = scmp.ne.s32.totalorder %s98, %s99
      %p113 = scmp.eq.s32.totalorder %s23, 1
      %p114 = por %p112, %p113
      %p116 = scmp.ne.s32.totalorder %s99, %s115
      %p117 = scmp.eq.s32.totalorder %s23, 0
      %p118 = por %p116, %p117
      %s119 = ssub.s32 %s24, %s36
      %p120 = scmp.eq.s32.totalorder %s119, 0
      %s122 = sadd.s32 %s121, 1
      %s123 = scalar_select %p120, %s121, %s122
      %p126 = pneg %p120
      %p127 = scmp.eq.s32.totalorder %s17, 1
      %p128 = por %p126, %p127
      %p129 = scmp.ne.s32.totalorder %s121, %s124
      %p130 = scmp.eq.s32.totalorder %s17, 0
      %p131 = por %p129, %p130
      %p132 = scmp.ne.s32.totalorder %s121, %s124
      %p133 = scmp.eq.s32.totalorder %s22, 1
      %p134 = por %p132, %p133
      %p135 = scmp.ne.s32.totalorder %s124, %s125
      %p136 = scmp.eq.s32.totalorder %s22, 0
      %p137 = por %p135, %p136
      %p138 = scmp.ne.s32.totalorder %s124, %s125
      %p139 = scmp.eq.s32.totalorder %s23, 1
      %p140 = por %p138, %p139
      %p142 = scmp.ne.s32.totalorder %s125, %s141
      %p143 = scmp.eq.s32.totalorder %s23, 0
      %p144 = por %p142, %p143
      %s145 = ssub.s32 %s24, %s36
      %p146 = scmp.eq.s32.totalorder %s145, 0
      %s148 = sadd.s32 %s147, 1
      %s149 = scalar_select %p146, %s147, %s148
      %p152 = pneg %p146
      %p153 = scmp.eq.s32.totalorder %s17, 1
      %p154 = por %p152, %p153
      %p155 = scmp.ne.s32.totalorder %s147, %s150
      %p156 = scmp.eq.s32.totalorder %s17, 0
      %p157 = por %p155, %p156
      %p158 = scmp.ne.s32.totalorder %s147, %s150
      %p159 = scmp.eq.s32.totalorder %s22, 1
      %p160 = por %p158, %p159
      %p161 = scmp.ne.s32.totalorder %s150, %s151
      %p162 = scmp.eq.s32.totalorder %s22, 0
      %p163 = por %p161, %p162
      %p164 = scmp.ne.s32.totalorder %s150, %s151
      %p165 = scmp.eq.s32.totalorder %s23, 1
      %p166 = por %p164, %p165
      %p168 = scmp.ne.s32.totalorder %s151, %s167
      %p169 = scmp.eq.s32.totalorder %s23, 0
      %p170 = por %p168, %p169
      %p171 = scmp.le.s32.totalorder 1, %s17
      %p172 = scmp.lt.s32.totalorder %s17, 3
      %p173 = pnand %p171, %p172
      %p174 = pneg %p173
      // Predicated region
      $region9: #{tpu_custom_call.1} parent=5 // pred_check
        _
      $region10: #{tpu_custom_call.1} parent=5 // pred_check_branch
        %176 = sbr.rel (%p173) target = $region12
      $region11: #{tpu_custom_call.1} parent=5 // pred_region
        %s177 = ssub.s32 %s17, 1
      $region12: #{tpu_custom_call.1} parent=5 // pred_fallthru
        _
      %p178 = scmp.lt.s32.totalorder %s17, 2
      // Predicated region
      $region13: #{tpu_custom_call.1} parent=5 // pred_check
        %p179 = pneg %p178
      $region14: #{tpu_custom_call.1} parent=5 // pred_check_branch
        %181 = sbr.rel (%p179) target = $region16
      $region15: #{tpu_custom_call.1} parent=5 // pred_region
        // Predicated region
        $region17: #{tpu_custom_call.1} parent=15 // pred_check
          %p182 = pneg %p51
        $region18: #{tpu_custom_call.1} parent=15 // pred_check_branch
          %184 = sbr.rel (%p182) target = $region20
        $region19: #{tpu_custom_call.1} parent=15 // pred_region
          %s185 = sand.u32 %s41, 1
          %s186 = scalar_lea.sflag [#allocation6], %s185
          %s187 = sand.u32 %s41, 1
          %s188 = smul.addr %s187, 16
          %s189 = scalar_lea.vmem [#allocation5], %s188
          %s190 = sadd.s32 %s24, %s25
          %s191 = smul.u32 2, %s190
          %193 = vsyncadd %s186, 0
          %s194 = smul.addr %s191, 8
          %s195 = scalar_lea.hbm %s0, %s194
          %s196 = sshll.u32 %s195, 4
          %s197 = int_to_ptr.hbm [resolvable:$true] %s196
          %s198 = sshll.u32 %s189, 4
          %s199 = int_to_ptr.vmem [resolvable:$true] %s198
          %204 = dma.hbm_to_vmem [thread:$0]  %s197, 256, %s199, %s186, 128, 128, 8
        $region20: #{tpu_custom_call.1} parent=15 // pred_fallthru
          _
        // Predicated region
        $region21: #{tpu_custom_call.1} parent=15 // pred_check
          %p205 = pneg %p79
        $region22: #{tpu_custom_call.1} parent=15 // pred_check_branch
          %207 = sbr.rel (%p205) target = $region24
        $region23: #{tpu_custom_call.1} parent=15 // pred_region
          %s208 = sand.u32 %s69, 1
          %s209 = scalar_lea.sflag [#allocation8], %s208
          %s210 = sand.u32 %s69, 1
          %s211 = smul.addr %s210, 16
          %s212 = scalar_lea.vmem [#allocation7], %s211
          %s213 = sadd.s32 %s24, %s25
          %s214 = smul.u32 2, %s213
          %216 = vsyncadd %s209, 0
          %s217 = smul.addr %s214, 8
          %s218 = scalar_lea.hbm %s1, %s217
          %s219 = sshll.u32 %s218, 4
          %s220 = int_to_ptr.hbm [resolvable:$true] %s219
          %s221 = sshll.u32 %s212, 4
          %s222 = int_to_ptr.vmem [resolvable:$true] %s221
          %227 = dma.hbm_to_vmem [thread:$0]  %s220, 256, %s222, %s209, 128, 128, 8
        $region24: #{tpu_custom_call.1} parent=15 // pred_fallthru
          _
      $region16: #{tpu_custom_call.1} parent=5 // pred_fallthru
        _
      %p228 = scmp.le.s32.totalorder 1, %s17
      %p229 = scmp.lt.s32.totalorder %s17, 3
      %p230 = pnand %p228, %p229
      %p231 = pneg %p230
      // Predicated region
      $region25: #{tpu_custom_call.1} parent=5 // pred_check
        _
      $region26: #{tpu_custom_call.1} parent=5 // pred_check_branch
        %233 = sbr.rel (%p230) target = $region28
      $region27: #{tpu_custom_call.1} parent=5 // pred_region
        %s234 = ssub.s32 %s17, 1
        %s235 = sand.u32 %s44, 1
        %s236 = scalar_lea.sflag [#allocation6], %s235
        %s237 = sand.u32 %s44, 1
        %s238 = smul.addr %s237, 16
        %s239 = scalar_lea.vmem [#allocation5], %s238
        // Predicated region
        $region29: #{tpu_custom_call.1} parent=27 // pred_check
          %p240 = pneg %p57
        $region30: #{tpu_custom_call.1} parent=27 // pred_check_branch
          %242 = sbr.rel (%p240) target = $region32
        $region31: #{tpu_custom_call.1} parent=27 // pred_region
          %244 = dma.done %s236, 256
        $region32: #{tpu_custom_call.1} parent=27 // pred_fallthru
          _
        %s245 = sand.u32 %s72, 1
        %s246 = scalar_lea.sflag [#allocation8], %s245
        %s247 = sand.u32 %s72, 1
        %s248 = smul.addr %s247, 16
        %s249 = scalar_lea.vmem [#allocation7], %s248
        // Predicated region
        $region33: #{tpu_custom_call.1} parent=27 // pred_check
          %p250 = pneg %p85
        $region34: #{tpu_custom_call.1} parent=27 // pred_check_branch
          %252 = sbr.rel (%p250) target = $region36
        $region35: #{tpu_custom_call.1} parent=27 // pred_region
          %254 = dma.done %s246, 256
        $region36: #{tpu_custom_call.1} parent=27 // pred_fallthru
          _
        %s255 = sand.u32 %s44, 1
        %s256 = scalar_lea.sflag [#allocation6], %s255
        %s257 = sand.u32 %s44, 1
        %s258 = smul.addr %s257, 16
        %s259 = scalar_lea.vmem [#allocation5], %s258
        %p260 = pneg %p57
        %p261 = pneg %p54
        %s262 = sand.u32 %s72, 1
        %s263 = scalar_lea.sflag [#allocation8], %s262
        %s264 = sand.u32 %s72, 1
        %s265 = smul.addr %s264, 16
        %s266 = scalar_lea.vmem [#allocation7], %s265
        %p267 = pneg %p85
        %p268 = pneg %p82
        %p269 = pneg %p111
        %p270 = pneg %p108
        %p271 = scmp.lt.s32.totalorder %s26, 1
        %s272 = scalar_select %p271, %s26, 1
        %s273 = scalar_lea.vmem %s2, %s272
        %p274 = pneg %p137
        %p275 = pneg %p134
        %p276 = scmp.lt.s32.totalorder %s26, 1
        %s277 = scalar_select %p276, %s26, 1
        %s278 = scalar_lea.vmem %s3, %s277
        %p279 = pneg %p163
        %p280 = pneg %p160
        %p281 = scmp.lt.s32.totalorder %s26, 1
        %s282 = scalar_select %p281, %s26, 1
        %s283 = scalar_lea.vmem %s4, %s282
        %s284 = sadd.s32 %s26, %s27
        %s285 = smul.u32 2, %s284
        %s286 = sadd.s32 %s26, %s27
        %s287 = smul.u32 2, %s286
        %p288 = scmp.lt.s32.totalorder %s26, 1
        %s289 = scalar_select %p288, %s26, 1
        %s290 = scalar_lea.vmem %s2, %s289
        %p291 = scmp.lt.s32.totalorder %s26, 1
        %s292 = scalar_select %p291, %s26, 1
        %s293 = scalar_lea.vmem %s3, %s292
        %p294 = scmp.lt.s32.totalorder %s26, 1
        %s295 = scalar_select %p294, %s26, 1
        %s296 = scalar_lea.vmem %s4, %s295
        %p297 = scmp.eq.s32.totalorder %s27, 0
        // Predicated region
        $region37: #{tpu_custom_call.1} parent=27 // pred_check
          %p298 = pneg %p297
        $region38: #{tpu_custom_call.1} parent=27 // pred_check_branch
          %300 = sbr.rel (%p298) target = $region40
        $region39: #{tpu_custom_call.1} parent=27 // pred_region
          %301 = vst [vmem:[#allocation2] sm:$0xff] 0.0
          %302 = vst [vmem:[#allocation3] sm:$0xff] 0.0
          %303 = vst [vmem:[#allocation4] sm:$0xff] 0.0
        $region40: #{tpu_custom_call.1} parent=27 // pred_fallthru
          _
        %v304 = vld [vmem:[%s239] sm:$0xff]
        %v305 = vld [vmem:[%s239 + $0x8] sm:$0xff]
        %v306 = vld [vmem:[%s249] sm:$0xff]
        %v307 = vld [vmem:[%s249 + $0x8] sm:$0xff]
        %v308 = vld [vmem:[#allocation2] sm:$0xff]
        %v309 = vmul.f32 %v304, %v304
        %v310 = vmul.f32 %v305, %v305
        %v311 = vadd.f32 %v309, %v310
        %v312 = vadd.f32 %v308, %v311
        %313 = vst [vmem:[#allocation2] sm:$0xff] %v312
        %v314 = vld [vmem:[#allocation3] sm:$0xff]
        %v315 = vmul.f32 %v306, %v306
        %v316 = vmul.f32 %v307, %v307
        %v317 = vadd.f32 %v315, %v316
        %v318 = vadd.f32 %v314, %v317
        %319 = vst [vmem:[#allocation3] sm:$0xff] %v318
        %v320 = vld [vmem:[#allocation4] sm:$0xff]
        %v321 = vmul.f32 %v304, %v306
        %v322 = vmul.f32 %v305, %v307
        %v323 = vadd.f32 %v321, %v322
        %v324 = vadd.f32 %v320, %v323
        %325 = vst [vmem:[#allocation4] sm:$0xff] %v324
        // Predicated region
        $region41: #{tpu_custom_call.1} parent=27 // pred_check
          %p326 = pneg %p297
        $region42: #{tpu_custom_call.1} parent=27 // pred_check_branch
          %328 = sbr.rel (%p326) target = $region44
        $region43: #{tpu_custom_call.1} parent=27 // pred_region
          %v329 = vld [vmem:[#allocation2] sm:$0xff]
          %330 = vadd.xlane.f32.xlu0 %v329
          %v331 = vpop.xlane.xlu0 %330
          %v332 = vrot.slane %v331, 4
          %v333 = vadd.f32 %v331, %v332
          %v334 = vrot.slane %v333, 2
          %v335 = vadd.f32 %v333, %v334
          %v336 = vrot.slane %v335, 1
          %v337 = vadd.f32 %v335, %v336
          %s338 = vtos %v337
          %v339 = vstv %s338
          %vm340 = vcmask 0
          %341 = vst.msk [vmem:[%s290] sm:$0x1] %vm340, %v339
          %v342 = vld [vmem:[#allocation3] sm:$0xff]
          %343 = vadd.xlane.f32.xlu0 %v342
          %v344 = vpop.xlane.xlu0 %343
          %v345 = vrot.slane %v344, 4
          %v346 = vadd.f32 %v344, %v345
          %v347 = vrot.slane %v346, 2
          %v348 = vadd.f32 %v346, %v347
          %v349 = vrot.slane %v348, 1
          %v350 = vadd.f32 %v348, %v349
          %s351 = vtos %v350
          %v352 = vstv %s351
          %353 = vst.msk [vmem:[%s293] sm:$0x1] %vm340, %v352
          %v354 = vld [vmem:[#allocation4] sm:$0xff]
          %355 = vadd.xlane.f32.xlu0 %v354
          %v356 = vpop.xlane.xlu0 %355
          %v357 = vrot.slane %v356, 4
          %v358 = vadd.f32 %v356, %v357
          %v359 = vrot.slane %v358, 2
          %v360 = vadd.f32 %v358, %v359
          %v361 = vrot.slane %v360, 1
          %v362 = vadd.f32 %v360, %v361
          %s363 = vtos %v362
          %v364 = vstv %s363
          %365 = vst.msk [vmem:[%s296] sm:$0x1] %vm340, %v364
        $region44: #{tpu_custom_call.1} parent=27 // pred_fallthru
          _
        %p366 = scmp.lt.s32.totalorder %s26, 1
        %s367 = scalar_select %p366, %s26, 1
        %s368 = scalar_lea.vmem %s2, %s367
        %p369 = scmp.lt.s32.totalorder %s26, 1
        %s370 = scalar_select %p369, %s26, 1
        %s371 = scalar_lea.vmem %s3, %s370
        %p372 = scmp.lt.s32.totalorder %s26, 1
        %s373 = scalar_select %p372, %s26, 1
        %s374 = scalar_lea.vmem %s4, %s373
        // Predicated region
        $region45: #{tpu_custom_call.1} parent=27 // pred_check
          %p375 = pneg %p108
        $region46: #{tpu_custom_call.1} parent=27 // pred_check_branch
          %377 = sbr.rel (%p375) target = $region48
        $region47: #{tpu_custom_call.1} parent=27 // pred_region
          _
        $region48: #{tpu_custom_call.1} parent=27 // pred_fallthru
          _
        // Predicated region
        $region49: #{tpu_custom_call.1} parent=27 // pred_check
          %p378 = pneg %p134
        $region50: #{tpu_custom_call.1} parent=27 // pred_check_branch
          %380 = sbr.rel (%p378) target = $region52
        $region51: #{tpu_custom_call.1} parent=27 // pred_region
          _
        $region52: #{tpu_custom_call.1} parent=27 // pred_fallthru
          _
        // Predicated region
        $region53: #{tpu_custom_call.1} parent=27 // pred_check
          %p381 = pneg %p160
        $region54: #{tpu_custom_call.1} parent=27 // pred_check_branch
          %383 = sbr.rel (%p381) target = $region56
        $region55: #{tpu_custom_call.1} parent=27 // pred_region
          _
        $region56: #{tpu_custom_call.1} parent=27 // pred_fallthru
          _
      $region28: #{tpu_custom_call.1} parent=5 // pred_fallthru
        _
      %p384 = scmp.le.s32.totalorder 2, %s17
      // Predicated region
      $region57: #{tpu_custom_call.1} parent=5 // pred_check
        %p385 = pneg %p384
      $region58: #{tpu_custom_call.1} parent=5 // pred_check_branch
        %387 = sbr.rel (%p385) target = $region60
      $region59: #{tpu_custom_call.1} parent=5 // pred_region
        %s388 = ssub.s32 %s17, 2
        // Predicated region
        $region61: #{tpu_custom_call.1} parent=59 // pred_check
          %p389 = pneg %p114
        $region62: #{tpu_custom_call.1} parent=59 // pred_check_branch
          %391 = sbr.rel (%p389) target = $region64
        $region63: #{tpu_custom_call.1} parent=59 // pred_region
          %p392 = scmp.lt.s32.totalorder %s28, 1
          %s393 = scalar_select %p392, %s28, 1
          %s394 = scalar_lea.vmem %s2, %s393
        $region64: #{tpu_custom_call.1} parent=59 // pred_fallthru
          _
        // Predicated region
        $region65: #{tpu_custom_call.1} parent=59 // pred_check
          %p395 = pneg %p140
        $region66: #{tpu_custom_call.1} parent=59 // pred_check_branch
          %397 = sbr.rel (%p395) target = $region68
        $region67: #{tpu_custom_call.1} parent=59 // pred_region
          %p398 = scmp.lt.s32.totalorder %s28, 1
          %s399 = scalar_select %p398, %s28, 1
          %s400 = scalar_lea.vmem %s3, %s399
        $region68: #{tpu_custom_call.1} parent=59 // pred_fallthru
          _
        // Predicated region
        $region69: #{tpu_custom_call.1} parent=59 // pred_check
          %p401 = pneg %p166
        $region70: #{tpu_custom_call.1} parent=59 // pred_check_branch
          %403 = sbr.rel (%p401) target = $region72
        $region71: #{tpu_custom_call.1} parent=59 // pred_region
          %p404 = scmp.lt.s32.totalorder %s28, 1
          %s405 = scalar_select %p404, %s28, 1
          %s406 = scalar_lea.vmem %s4, %s405
        $region72: #{tpu_custom_call.1} parent=59 // pred_fallthru
          _
      $region60: #{tpu_custom_call.1} parent=5 // pred_fallthru
        _
    $region6: #{tpu_custom_call.1} parent=1 // loop_footer
      %s21 = sadd.s32 1, %s17
    $region7: #{tpu_custom_call.1} parent=1 // loop_footer_branch
      %16 = sbr.rel target = $region3
    $region8: #{tpu_custom_call.1} parent=1 // loop_exit
      _
    %407 = vsyncpa [#allocation6], 1
    %s408 = scalar_lea.sflag [#allocation6], 1
    %409 = vsyncpa %s408, 1
    %410 = vsyncpa [#allocation8], 1
    %s411 = scalar_lea.sflag [#allocation8], 1
    %412 = vsyncpa %s411, 1

</llo_original>
